<compile_context>
chip_gen: v6e
topology: v6e:2x2x1
jax: 0.10.0
libtpu: 0.0.40
codegen_flags: <defaults>
</compile_context>

<pallas_src>
import jax
import jax.numpy as jnp
import numpy as np
from jax.experimental import pallas as pl
from jax.experimental.pallas import tpu as pltpu


def gat_kernel(s1_ref, s2_ref, wh_ref, adj_ref, out_ref, acc_scr, l_scr):
    ki = pl.program_id(1)

    @pl.when(ki == 0)
    def _init():
        acc_scr[...] = jnp.zeros_like(acc_scr)
        l_scr[...] = jnp.zeros_like(l_scr)

    # Attention logits for this (q, k) tile; s1/s2 were precomputed host-side.
    x = s1_ref[...] + s2_ref[...]                      # (tq, tk), compute dtype
    # exp(sigmoid(x)) = sqrt(e) * exp(0.5*tanh(0.5*x)); sqrt(e) cancels in the
    # softmax -> only 2 EUP transcendentals (tanh, exp) per element.
    q = jnp.exp(0.5 * jnp.tanh(0.5 * x))
    # Mask by multiply with the widened 0/1 adjacency (no select on int8 mask).
    p = adj_ref[...].astype(q.dtype) * q               # (tq, tk)

    # Streaming (max-free) softmax accumulation; values bounded in (0, e^0.5).
    l_scr[...] += jnp.sum(p.astype(jnp.float32), axis=1, keepdims=True)
    acc_scr[...] += jnp.dot(p, wh_ref[...], preferred_element_type=jnp.float32)

    @pl.when(ki == pl.num_programs(1) - 1)
    def _finalize():
        denom = l_scr[...]
        # Guard rows with no neighbors (incl. padded query rows): output zeros.
        safe = jnp.where(denom > 0.0, denom, 1.0)
        inv = pl.reciprocal(safe, approx=True)         # EUP slot
        inv = inv * (2.0 - safe * inv)                 # one Newton step -> ~f32
        out_ref[...] = (acc_scr[...] * inv).astype(out_ref.dtype)


def _round_up(x, m):
    return ((x + m - 1) // m) * m


def _pick_tile(n_pad):
    # Prefer 256 (MXU-friendly contraction, safe VMEM on v7x), else 128.
    for t in (256, 128):
        if n_pad % t == 0:
            return t
    return n_pad  # n_pad is always a multiple of 128, so this is unreachable.


def gat_forward(h, W, a, adj, *, block_q=None, block_k=None,
                compute_dtype=jnp.float32):
    """Pallas GAT forward.  adj may be float/int/bool (only `adj > 0` is used)."""
    N, _ = h.shape
    f_out = W.shape[1]
    f_pad = _round_up(f_out, 128)
    n_pad = _round_up(N, 128)

    # ---- Hoisted precompute (tiny GEMMs, done once in XLA) -------------------
    wh = h.astype(jnp.float32) @ W.astype(jnp.float32)            # (N, f_out)
    s1 = wh @ a[:f_out, :].astype(jnp.float32)                    # (N, 1)
    s2 = wh @ a[f_out:, :].astype(jnp.float32)                    # (N, 1)

    # Zero-pad to lane/sublane-friendly shapes and pre-cast to the compute
    # dtype so there are no per-step casts inside the kernel.
    wh_p = jnp.pad(wh, ((0, n_pad - N), (0, f_pad - f_out))).astype(compute_dtype)
    s1_p = jnp.pad(s1, ((0, n_pad - N), (0, 0))).astype(compute_dtype)
    s2_p = jnp.pad(s2.T, ((0, 0), (0, n_pad - N))).astype(compute_dtype)
    adj_p = jnp.pad((adj > 0).astype(jnp.int8),
                    ((0, n_pad - N), (0, n_pad - N)))              # (n_pad, n_pad)

    tq = block_q or _pick_tile(n_pad)
    # Keep >= 2 query blocks when possible so both v7x TensorCores get work.
    if block_q is None and tq == n_pad and n_pad >= 256:
        tq = n_pad // 2
    tk = block_k or _pick_tile(n_pad)
    assert n_pad % tq == 0 and n_pad % tk == 0

    grid = (n_pad // tq, n_pad // tk)

    out_padded = pl.pallas_call(
        gat_kernel,
        out_shape=jax.ShapeDtypeStruct((n_pad, f_pad), h.dtype),
        grid_spec=pltpu.PrefetchScalarGridSpec(
            num_scalar_prefetch=0,
            grid=grid,
            in_specs=[
                pl.BlockSpec((tq, 1), lambda qi, ki: (qi, 0)),      # s1 (query)
                pl.BlockSpec((1, tk), lambda qi, ki: (0, ki)),      # s2 (key)
                pl.BlockSpec((tk, f_pad), lambda qi, ki: (ki, 0)),  # Wh (key rows)
                pl.BlockSpec((tq, tk), lambda qi, ki: (qi, ki)),    # adj tile (int8)
            ],
            out_specs=pl.BlockSpec((tq, f_pad), lambda qi, ki: (qi, 0)),
            scratch_shapes=[
                pltpu.VMEM((tq, f_pad), jnp.float32),   # output accumulator
                pltpu.VMEM((tq, 1), jnp.float32),       # softmax denominator
            ],
        ),
        compiler_params=pltpu.CompilerParams(
            # query axis sharded across TensorCores (v7x); key axis is the
            # streamed reduction (last in grid).
            dimension_semantics=("parallel", "arbitrary"),
        ),
    )(s1_p, s2_p, wh_p, adj_p)

    return out_padded[:N, :f_out]


def xavier_uniform(key, shape, gain):
    fan_in, fan_out = shape[0], shape[1]
    bound = gain * np.sqrt(6.0 / (fan_in + fan_out))
    return jax.random.uniform(key, shape, dtype=jnp.float32,
                              minval=-bound, maxval=bound)


def reference_forward(h, W, a, adj):
    f_out = W.shape[1]
    wh = h @ W
    e = jax.nn.sigmoid(wh @ a[:f_out, :] + (wh @ a[f_out:, :]).T)
    att = jnp.where(adj > 0, e, jnp.full_like(e, -9.0e15))
    att = jax.nn.softmax(att, axis=1)
    return att @ wh


def _make_graph(key_h, key_adj, n, f_in):
    h = jax.random.normal(key_h, (n, f_in), dtype=jnp.float32)
    adj = (jax.random.uniform(key_adj, (n, n)) > 0.5).astype(jnp.float32)
    adj = jnp.maximum(adj, jnp.eye(n, dtype=jnp.float32))   # self-loops
    return h, adj


if __name__ == "__main__":
    key = jax.random.PRNGKey(0)
    k_w, k_a, k_h1, k_adj1, k_h2, k_adj2, k_h3, k_adj3 = jax.random.split(key, 8)

    in_features, out_features = 16, 32

    # Deterministic parameter init (mirrors nn.init.xavier_uniform_, gain=1.414).
    W = xavier_uniform(k_w, (in_features, out_features), gain=1.414)
    a = xavier_uniform(k_a, (2 * out_features, 1), gain=1.414)

    # ---- test 1: small graph (N=32 -> padded to 128), f32, strict check ------
    h1, adj1 = _make_graph(k_h1, k_adj1, 32, in_features)
    out1 = jax.block_until_ready(gat_forward(h1, W, a, adj1))
    ref1 = reference_forward(h1, W, a, adj1)
    np.testing.assert_allclose(np.asarray(out1), np.asarray(ref1),
                               rtol=1e-5, atol=1e-5)

    # ---- test 2: N=256 (2x1 grid: tq=128, tk=256), bf16 elementwise + MXU ----
    h2, adj2 = _make_graph(k_h2, k_adj2, 256, in_features)
    out2 = jax.block_until_ready(
        gat_forward(h2, W, a, adj2, compute_dtype=jnp.bfloat16))
    ref2 = reference_forward(h2, W, a, adj2)
    np.testing.assert_allclose(np.asarray(out2), np.asarray(ref2),
                               rtol=3e-2, atol=3e-2)

    # ---- test 3: non-multiple-of-128 N (exercises N padding path), f32 -------
    h3, adj3 = _make_graph(k_h3, k_adj3, 200, in_features)
    out3 = jax.block_until_ready(gat_forward(h3, W, a, adj3))
    ref3 = reference_forward(h3, W, a, adj3)
    np.testing.assert_allclose(np.asarray(out3), np.asarray(ref3),
                               rtol=1e-5, atol=1e-5)

    print("KERNEL_OK")
</pallas_src>

<mosaic_0001>
module attributes {stable_mosaic.version = 11 : i64} {
  func.func @gat_kernel(%arg0: i32, %arg1: i32, %arg2: memref<128x1xf32, #tpu.memory_space<vmem>>, %arg3: memref<1x128xf32, #tpu.memory_space<vmem>>, %arg4: memref<128x128xf32, #tpu.memory_space<vmem>>, %arg5: memref<128x128xi8, #tpu.memory_space<vmem>>, %arg6: memref<128x128xf32, #tpu.memory_space<vmem>>, %arg7: memref<128x128xf32, #tpu.memory_space<vmem>>, %arg8: memref<128x1xf32, #tpu.memory_space<vmem>>) attributes {dimension_semantics = [#tpu.dimension_semantics<parallel>, #tpu.dimension_semantics<arbitrary>], iteration_bounds = array<i64: 1, 1>, scalar_prefetch = 0 : i64, scratch_operands = 2 : i64, tpu.core_type = #tpu.core_type<tc>, window_params = [{transform_indices = @transform_0, window_bounds = array<i64: 128, 1>}, {transform_indices = @transform_1, window_bounds = array<i64: 1, 128>}, {transform_indices = @transform_2, window_bounds = array<i64: 128, 128>}, {transform_indices = @transform_3, window_bounds = array<i64: 128, 128>}, {transform_indices = @transform_4, window_bounds = array<i64: 128, 128>}]} {
    %c0_i32 = arith.constant 0 : i32
    %0 = arith.cmpi eq, %arg1, %c0_i32 : i32
    %1 = arith.extui %0 : i1 to i32
    %c0_i32_0 = arith.constant 0 : i32
    %2 = arith.cmpi ne, %1, %c0_i32_0 : i32
    scf.if %2 {
      %cst_21 = arith.constant 0.000000e+00 : f32
      %30 = vector.broadcast %cst_21 : f32 to vector<128x128xf32>
      %c0_22 = arith.constant 0 : index
      %c0_23 = arith.constant 0 : index
      %31 = vector.load %arg7[%c0_22, %c0_23] : memref<128x128xf32, #tpu.memory_space<vmem>>, vector<128x128xf32>
      tpu.vector_store %arg7[%c0_22, %c0_23], %30 {strides = array<i32>} : memref<128x128xf32, #tpu.memory_space<vmem>>, vector<128x128xf32>,
      %cst_24 = arith.constant 0.000000e+00 : f32
      %32 = vector.broadcast %cst_24 : f32 to vector<128x1xf32>
      %c0_25 = arith.constant 0 : index
      %c0_26 = arith.constant 0 : index
      %33 = vector.load %arg8[%c0_25, %c0_26] : memref<128x1xf32, #tpu.memory_space<vmem>>, vector<128x1xf32>
      tpu.vector_store %arg8[%c0_25, %c0_26], %32 {strides = array<i32>} : memref<128x1xf32, #tpu.memory_space<vmem>>, vector<128x1xf32>,
    } else {
    }
    %c0 = arith.constant 0 : index
    %c0_1 = arith.constant 0 : index
    %3 = vector.load %arg2[%c0, %c0_1] : memref<128x1xf32, #tpu.memory_space<vmem>>, vector<128x1xf32>
    %c0_2 = arith.constant 0 : index
    %c0_3 = arith.constant 0 : index
    %4 = vector.load %arg3[%c0_2, %c0_3] : memref<1x128xf32, #tpu.memory_space<vmem>>, vector<1x128xf32>
    %5 = vector.broadcast %3 : vector<128x1xf32> to vector<128x128xf32>
    %6 = vector.broadcast %4 : vector<1x128xf32> to vector<128x128xf32>
    %7 = arith.addf %5, %6 : vector<128x128xf32>
    %cst = arith.constant 5.000000e-01 : f32
    %8 = vector.broadcast %cst : f32 to vector<128x128xf32>
    %9 = arith.mulf %8, %7 : vector<128x128xf32>
    %10 = math.tanh %9 : vector<128x128xf32>
    %cst_4 = arith.constant 5.000000e-01 : f32
    %11 = vector.broadcast %cst_4 : f32 to vector<128x128xf32>
    %12 = arith.mulf %11, %10 : vector<128x128xf32>
    %13 = math.exp %12 : vector<128x128xf32>
    %c0_5 = arith.constant 0 : index
    %c0_6 = arith.constant 0 : index
    %14 = vector.load %arg5[%c0_5, %c0_6] : memref<128x128xi8, #tpu.memory_space<vmem>>, vector<128x128xi8>
    %15 = arith.sitofp %14 : vector<128x128xi8> to vector<128x128xf32>
    %16 = arith.mulf %15, %13 : vector<128x128xf32>
    %c0_7 = arith.constant 0 : index
    %c0_8 = arith.constant 0 : index
    %17 = vector.load %arg8[%c0_7, %c0_8] : memref<128x1xf32, #tpu.memory_space<vmem>>, vector<128x1xf32>
    %cst_9 = arith.constant dense<0.000000e+00> : vector<128xf32>
    %18 = vector.multi_reduction <add>, %16, %cst_9 [1] : vector<128x128xf32> to vector<128xf32>
    %19 = vector.shape_cast %18 : vector<128xf32> to vector<128x1xf32>
    %20 = arith.addf %17, %19 : vector<128x1xf32>
    %c0_10 = arith.constant 0 : index
    %c0_11 = arith.constant 0 : index
    %21 = vector.load %arg8[%c0_10, %c0_11] : memref<128x1xf32, #tpu.memory_space<vmem>>, vector<128x1xf32>
    tpu.vector_store %arg8[%c0_10, %c0_11], %20 {strides = array<i32>} : memref<128x1xf32, #tpu.memory_space<vmem>>, vector<128x1xf32>,
    %c0_12 = arith.constant 0 : index
    %c0_13 = arith.constant 0 : index
    %22 = vector.load %arg7[%c0_12, %c0_13] : memref<128x128xf32, #tpu.memory_space<vmem>>, vector<128x128xf32>
    %c0_14 = arith.constant 0 : index
    %c0_15 = arith.constant 0 : index
    %23 = vector.load %arg4[%c0_14, %c0_15] : memref<128x128xf32, #tpu.memory_space<vmem>>, vector<128x128xf32>
    %cst_16 = arith.constant dense<0.000000e+00> : vector<128x128xf32>
    %24 = tpu.matmul %16, %23, %cst_16 {dimension_numbers = #tpu.dot_dimension_numbers<[1], [0], [0], [1], [0, 0, 1, 1], [], []>} : vector<128x128xf32>, vector<128x128xf32>, vector<128x128xf32> -> vector<128x128xf32>
    %25 = arith.addf %22, %24 : vector<128x128xf32>
    %c0_17 = arith.constant 0 : index
    %c0_18 = arith.constant 0 : index
    %26 = vector.load %arg7[%c0_17, %c0_18] : memref<128x128xf32, #tpu.memory_space<vmem>>, vector<128x128xf32>
    tpu.vector_store %arg7[%c0_17, %c0_18], %25 {strides = array<i32>} : memref<128x128xf32, #tpu.memory_space<vmem>>, vector<128x128xf32>,
    %c0_i32_19 = arith.constant 0 : i32
    %27 = arith.cmpi eq, %arg1, %c0_i32_19 : i32
    %28 = arith.extui %27 : i1 to i32
    %c0_i32_20 = arith.constant 0 : i32
    %29 = arith.cmpi ne, %28, %c0_i32_20 : i32
    scf.if %29 {
      %c0_21 = arith.constant 0 : index
      %c0_22 = arith.constant 0 : index
      %30 = vector.load %arg8[%c0_21, %c0_22] : memref<128x1xf32, #tpu.memory_space<vmem>>, vector<128x1xf32>
      %cst_23 = arith.constant 0.000000e+00 : f32
      %31 = vector.broadcast %cst_23 : f32 to vector<128x1xf32>
      %32 = arith.cmpf ogt, %30, %31 : vector<128x1xf32>
      %cst_24 = arith.constant 1.000000e+00 : f32
      %33 = vector.broadcast %cst_24 : f32 to vector<128x1xf32>
      %34 = arith.select %32, %30, %33 : vector<128x1xi1>, vector<128x1xf32>
      %35 = tpu.reciprocal %34 {approx = true} : vector<128x1xf32> -> vector<128x1xf32>
      %36 = arith.mulf %34, %35 : vector<128x1xf32>
      %cst_25 = arith.constant 2.000000e+00 : f32
      %37 = vector.broadcast %cst_25 : f32 to vector<128x1xf32>
      %38 = arith.subf %37, %36 : vector<128x1xf32>
      %39 = arith.mulf %35, %38 : vector<128x1xf32>
      %c0_26 = arith.constant 0 : index
      %c0_27 = arith.constant 0 : index
      %40 = vector.load %arg7[%c0_26, %c0_27] : memref<128x128xf32, #tpu.memory_space<vmem>>, vector<128x128xf32>
      %41 = vector.broadcast %39 : vector<128x1xf32> to vector<128x128xf32>
      %42 = arith.mulf %40, %41 : vector<128x128xf32>
      %c0_28 = arith.constant 0 : index
      %c0_29 = arith.constant 0 : index
      %43 = vector.load %arg6[%c0_28, %c0_29] : memref<128x128xf32, #tpu.memory_space<vmem>>, vector<128x128xf32>
      tpu.vector_store %arg6[%c0_28, %c0_29], %42 {strides = array<i32>} : memref<128x128xf32, #tpu.memory_space<vmem>>, vector<128x128xf32>,
    } else {
    }
    return
  }
  func.func @transform_0(%arg0: i32, %arg1: i32) -> (i32, i32) {
    %c0_i32 = arith.constant 0 : i32
    %c0_i32_0 = arith.constant 0 : i32
    return %arg0, %c0_i32 : i32, i32
  }
  func.func @transform_1(%arg0: i32, %arg1: i32) -> (i32, i32) {
    %c0_i32 = arith.constant 0 : i32
    %c0_i32_0 = arith.constant 0 : i32
    return %c0_i32, %arg1 : i32, i32
  }
  func.func @transform_2(%arg0: i32, %arg1: i32) -> (i32, i32) {
    %c0_i32 = arith.constant 0 : i32
    %c0_i32_0 = arith.constant 0 : i32
    return %arg1, %c0_i32 : i32, i32
  }
  func.func @transform_3(%arg0: i32, %arg1: i32) -> (i32, i32) {
    %c0_i32 = arith.constant 0 : i32
    return %arg0, %arg1 : i32, i32
  }
  func.func @transform_4(%arg0: i32, %arg1: i32) -> (i32, i32) {
    %c0_i32 = arith.constant 0 : i32
    %c0_i32_0 = arith.constant 0 : i32
    return %arg0, %c0_i32 : i32, i32
  }
}

</mosaic_0001>

<llo_original>
// kernel: tpu_custom_call.1
$region0: #{tpu_custom_call.1}
  #allocation0 [shape = 'u32[]', space=smem, size = 0x4, offset = 0x4, fixed_abs, tag = 'smem constant byte address 0x4 - core index']
  #allocation1 [shape = 'u32[144,128]{1,0:T(1,128)}', space=vmem, size = 0x12000, scoped, tag = 'internal scratch']
  #allocation2 [shape = 'f32[128,128]{1,0:T(8,128)}', space=vmem, size = 0x10000, scoped, tag = 'scratch operand']
  #allocation3 [shape = 'f32[128,1]{1,0:T(8,128)}', space=vmem, size = 0x10000, scoped, tag = 'scratch operand']
  %s0 = inlined_call_operand.vmem [shape: f32[128,1], index: 0, kind: input, shape index: {}]
  %s1 = inlined_call_operand.vmem [shape: f32[1,128], index: 1, kind: input, shape index: {}]
  %s2 = inlined_call_operand.vmem [shape: f32[128,128], index: 2, kind: input, shape index: {}]
  %s3 = inlined_call_operand.hbm [shape: s8[128,128], index: 3, kind: input, shape index: {}]
  %s4 = inlined_call_operand.hbm [shape: f32[128,128], index: 4, kind: output, shape index: {}]
  %s5 = sld [smem:[#allocation0]]
  $region38: #{tpu_custom_call.1} parent=0
    _
  %s7 = ssub.s32 1, %s5
  %s8 = scalar_select 0, %s7, %s5
  $region1: #{tpu_custom_call.1} parent=0
    #allocation4 [shape = 'u8[16384]{0}', space=vmem, size = 0x4000, scoped, tag = 'input window, operand 3, single buffered']
    #allocation5 [shape = 's32[1]{0}', space=sflag, size = 0x4, scoped, tag = 'scoped memory for tpu_custom_call.1']
    #allocation6 [shape = 's32[1]{0}', space=sflag, size = 0x4, scoped, tag = 'scoped memory for tpu_custom_call.1']
    #allocation7 [shape = 'u8[65536]{0}', space=vmem, size = 0x10000, scoped, tag = 'output window, operand 0, single buffered']
    %9 = vsyncpa [#allocation5], 0
    %10 = vsyncpa [#allocation6], 0
    // Predicated region
    $region2: #{tpu_custom_call.1} parent=1 // pred_check
      _
    $region3: #{tpu_custom_call.1} parent=1 // pred_check_branch
      %12 = sbr.rel (0) target = $region5
    $region4: #{tpu_custom_call.1} parent=1 // pred_region
      _
    $region5: #{tpu_custom_call.1} parent=1 // pred_fallthru
      _
    // Predicated region
    $region6: #{tpu_custom_call.1} parent=1 // pred_check
      _
    $region7: #{tpu_custom_call.1} parent=1 // pred_check_branch
      %14 = sbr.rel (0) target = $region9
    $region8: #{tpu_custom_call.1} parent=1 // pred_region
      _
    $region9: #{tpu_custom_call.1} parent=1 // pred_fallthru
      _
    // Predicated region
    $region10: #{tpu_custom_call.1} parent=1 // pred_check
      _
    $region11: #{tpu_custom_call.1} parent=1 // pred_check_branch
      %16 = sbr.rel (0) target = $region13
    $region12: #{tpu_custom_call.1} parent=1 // pred_region
      _
    $region13: #{tpu_custom_call.1} parent=1 // pred_fallthru
      _
    // Predicated region
    $region14: #{tpu_custom_call.1} parent=1 // pred_check
      _
    $region15: #{tpu_custom_call.1} parent=1 // pred_check_branch
      %18 = sbr.rel (0) target = $region17
    $region16: #{tpu_custom_call.1} parent=1 // pred_region
      %s20 = ssub.s32 512, 512
      %21 = vsyncadd [#allocation5], %s20
      %s22 = sshll.u32 [#allocation4], 4
      %s23 = int_to_ptr.vmem [resolvable:$true] %s22
      %28 = dma.hbm_to_vmem [thread:$0]  %s3, 512, %s23, [#allocation5], 128, 128, 8
    $region17: #{tpu_custom_call.1} parent=1 // pred_fallthru
      _
    // Predicated region
    $region18: #{tpu_custom_call.1} parent=1 // pred_check
      _
    $region19: #{tpu_custom_call.1} parent=1 // pred_check_branch
      %30 = sbr.rel (0) target = $region21
    $region20: #{tpu_custom_call.1} parent=1 // pred_region
      %31 = dma.done [#allocation5], 512
    $region21: #{tpu_custom_call.1} parent=1 // pred_fallthru
      _
    %p32 = scmp.eq.s32.totalorder 0, 0
    // Predicated region
    $region22: #{tpu_custom_call.1} parent=1 // pred_check
      %p33 = pneg %p32
    $region23: #{tpu_custom_call.1} parent=1 // pred_check_branch
      %35 = sbr.rel (%p33) target = $region25
    $region24: #{tpu_custom_call.1} parent=1 // pred_region
      %36 = vst [vmem:[#allocation2] sm:$0xff] 0.0
      %37 = vst [vmem:[#allocation2 + $0x8] sm:$0xff] 0.0
      %38 = vst [vmem:[#allocation2 + $0x10] sm:$0xff] 0.0
      %39 = vst [vmem:[#allocation2 + $0x18] sm:$0xff] 0.0
      %40 = vst [vmem:[#allocation2 + $0x20] sm:$0xff] 0.0
      %41 = vst [vmem:[#allocation2 + $0x28] sm:$0xff] 0.0
      %42 = vst [vmem:[#allocation2 + $0x30] sm:$0xff] 0.0
      %43 = vst [vmem:[#allocation2 + $0x38] sm:$0xff] 0.0
      %44 = vst [vmem:[#allocation2 + $0x40] sm:$0xff] 0.0
      %45 = vst [vmem:[#allocation2 + $0x48] sm:$0xff] 0.0
      %46 = vst [vmem:[#allocation2 + $0x50] sm:$0xff] 0.0
      %47 = vst [vmem:[#allocation2 + $0x58] sm:$0xff] 0.0
      %48 = vst [vmem:[#allocation2 + $0x60] sm:$0xff] 0.0
      %49 = vst [vmem:[#allocation2 + $0x68] sm:$0xff] 0.0
      %50 = vst [vmem:[#allocation2 + $0x70] sm:$0xff] 0.0
      %51 = vst [vmem:[#allocation2 + $0x78] sm:$0xff] 0.0
      %vm52 = vcmask 7168
      %53 = vst.msk [vmem:[#allocation3] sm:$0xff] %vm52, 0.0
      %54 = vst.msk [vmem:[#allocation3 + $0x8] sm:$0xff] %vm52, 0.0
      %55 = vst.msk [vmem:[#allocation3 + $0x10] sm:$0xff] %vm52, 0.0
      %56 = vst.msk [vmem:[#allocation3 + $0x18] sm:$0xff] %vm52, 0.0
      %57 = vst.msk [vmem:[#allocation3 + $0x20] sm:$0xff] %vm52, 0.0
      %58 = vst.msk [vmem:[#allocation3 + $0x28] sm:$0xff] %vm52, 0.0
      %59 = vst.msk [vmem:[#allocation3 + $0x30] sm:$0xff] %vm52, 0.0
      %60 = vst.msk [vmem:[#allocation3 + $0x38] sm:$0xff] %vm52, 0.0
      %61 = vst.msk [vmem:[#allocation3 + $0x40] sm:$0xff] %vm52, 0.0
      %62 = vst.msk [vmem:[#allocation3 + $0x48] sm:$0xff] %vm52, 0.0
      %63 = vst.msk [vmem:[#allocation3 + $0x50] sm:$0xff] %vm52, 0.0
      %64 = vst.msk [vmem:[#allocation3 + $0x58] sm:$0xff] %vm52, 0.0
      %65 = vst.msk [vmem:[#allocation3 + $0x60] sm:$0xff] %vm52, 0.0
      %66 = vst.msk [vmem:[#allocation3 + $0x68] sm:$0xff] %vm52, 0.0
      %67 = vst.msk [vmem:[#allocation3 + $0x70] sm:$0xff] %vm52, 0.0
      %68 = vst.msk [vmem:[#allocation3 + $0x78] sm:$0xff] %vm52, 0.0
    $region25: #{tpu_custom_call.1} parent=1 // pred_fallthru
      _
    %v69 = vld [vmem:[%s0] sm:$0xff]
    %v70 = vld [vmem:[%s0 + $0x8] sm:$0xff]
    %v71 = vld [vmem:[%s0 + $0x10] sm:$0xff]
    %v72 = vld [vmem:[%s0 + $0x18] sm:$0xff]
    %v73 = vld [vmem:[%s0 + $0x20] sm:$0xff]
    %v74 = vld [vmem:[%s0 + $0x28] sm:$0xff]
    %v75 = vld [vmem:[%s0 + $0x30] sm:$0xff]
    %v76 = vld [vmem:[%s0 + $0x38] sm:$0xff]
    %v77 = vld [vmem:[%s0 + $0x40] sm:$0xff]
    %v78 = vld [vmem:[%s0 + $0x48] sm:$0xff]
    %v79 = vld [vmem:[%s0 + $0x50] sm:$0xff]
    %v80 = vld [vmem:[%s0 + $0x58] sm:$0xff]
    %v81 = vld [vmem:[%s0 + $0x60] sm:$0xff]
    %v82 = vld [vmem:[%s0 + $0x68] sm:$0xff]
    %v83 = vld [vmem:[%s0 + $0x70] sm:$0xff]
    %v84 = vld [vmem:[%s0 + $0x78] sm:$0xff]
    %v85 = vld [vmem:[%s1] sm:$0x1]
    %87 = vset.pattern.permute.xlu0 0
    %88 = vperm.xlu0 %87, %v69
    %v89 = vpop.permute.xlu0 %88
    %92 = vset.pattern.permute.xlu0 0
    %93 = vperm.xlu0 %92, %v70
    %v94 = vpop.permute.xlu0 %93
    %97 = vset.pattern.permute.xlu0 0
    %98 = vperm.xlu0 %97, %v71
    %v99 = vpop.permute.xlu0 %98
    %102 = vset.pattern.permute.xlu0 0
    %103 = vperm.xlu0 %102, %v72
    %v104 = vpop.permute.xlu0 %103
    %107 = vset.pattern.permute.xlu0 0
    %108 = vperm.xlu0 %107, %v73
    %v109 = vpop.permute.xlu0 %108
    %112 = vset.pattern.permute.xlu0 0
    %113 = vperm.xlu0 %112, %v74
    %v114 = vpop.permute.xlu0 %113
    %117 = vset.pattern.permute.xlu0 0
    %118 = vperm.xlu0 %117, %v75
    %v119 = vpop.permute.xlu0 %118
    %122 = vset.pattern.permute.xlu0 0
    %123 = vperm.xlu0 %122, %v76
    %v124 = vpop.permute.xlu0 %123
    %127 = vset.pattern.permute.xlu0 0
    %128 = vperm.xlu0 %127, %v77
    %v129 = vpop.permute.xlu0 %128
    %132 = vset.pattern.permute.xlu0 0
    %133 = vperm.xlu0 %132, %v78
    %v134 = vpop.permute.xlu0 %133
    %137 = vset.pattern.permute.xlu0 0
    %138 = vperm.xlu0 %137, %v79
    %v139 = vpop.permute.xlu0 %138
    %142 = vset.pattern.permute.xlu0 0
    %143 = vperm.xlu0 %142, %v80
    %v144 = vpop.permute.xlu0 %143
    %147 = vset.pattern.permute.xlu0 0
    %148 = vperm.xlu0 %147, %v81
    %v149 = vpop.permute.xlu0 %148
    %152 = vset.pattern.permute.xlu0 0
    %153 = vperm.xlu0 %152, %v82
    %v154 = vpop.permute.xlu0 %153
    %157 = vset.pattern.permute.xlu0 0
    %158 = vperm.xlu0 %157, %v83
    %v159 = vpop.permute.xlu0 %158
    %162 = vset.pattern.permute.xlu0 0
    %163 = vperm.xlu0 %162, %v84
    %v164 = vpop.permute.xlu0 %163
    %v167 = vlaneseq
    %v168 = vshrl.u32 %v167, 7
    %v169 = vsub.s32 0, %v168
    %v170 = vrot.slane %v85, %v169
    %v172 = vadd.f32 %v89, %v170
    %v173 = vadd.f32 %v94, %v170
    %v174 = vadd.f32 %v99, %v170
    %v175 = vadd.f32 %v104, %v170
    %v176 = vadd.f32 %v109, %v170
    %v177 = vadd.f32 %v114, %v170
    %v178 = vadd.f32 %v119, %v170
    %v179 = vadd.f32 %v124, %v170
    %v180 = vadd.f32 %v129, %v170
    %v181 = vadd.f32 %v134, %v170
    %v182 = vadd.f32 %v139, %v170
    %v183 = vadd.f32 %v144, %v170
    %v184 = vadd.f32 %v149, %v170
    %v185 = vadd.f32 %v154, %v170
    %v186 = vadd.f32 %v159, %v170
    %v187 = vadd.f32 %v164, %v170
    %v188 = vmul.f32 %v172, 0.5
    %v189 = vmul.f32 %v173, 0.5
    %v190 = vmul.f32 %v174, 0.5
    %v191 = vmul.f32 %v175, 0.5
    %v192 = vmul.f32 %v176, 0.5
    %v193 = vmul.f32 %v177, 0.5
    %v194 = vmul.f32 %v178, 0.5
    %v195 = vmul.f32 %v179, 0.5
    %v196 = vmul.f32 %v180, 0.5
    %v197 = vmul.f32 %v181, 0.5
    %v198 = vmul.f32 %v182, 0.5
    %v199 = vmul.f32 %v183, 0.5
    %v200 = vmul.f32 %v184, 0.5
    %v201 = vmul.f32 %v185, 0.5
    %v202 = vmul.f32 %v186, 0.5
    %v203 = vmul.f32 %v187, 0.5
    %v204 = vtanh.pop %v188
    %v205 = vtanh.pop %v189
    %v206 = vtanh.pop %v190
    %v207 = vtanh.pop %v191
    %v208 = vtanh.pop %v192
    %v209 = vtanh.pop %v193
    %v210 = vtanh.pop %v194
    %v211 = vtanh.pop %v195
    %v212 = vtanh.pop %v196
    %v213 = vtanh.pop %v197
    %v214 = vtanh.pop %v198
    %v215 = vtanh.pop %v199
    %v216 = vtanh.pop %v200
    %v217 = vtanh.pop %v201
    %v218 = vtanh.pop %v202
    %v219 = vtanh.pop %v203
    %v220 = vmul.f32 %v204, 0.5
    %v221 = vmul.f32 %v205, 0.5
    %v222 = vmul.f32 %v206, 0.5
    %v223 = vmul.f32 %v207, 0.5
    %v224 = vmul.f32 %v208, 0.5
    %v225 = vmul.f32 %v209, 0.5
    %v226 = vmul.f32 %v210, 0.5
    %v227 = vmul.f32 %v211, 0.5
    %v228 = vmul.f32 %v212, 0.5
    %v229 = vmul.f32 %v213, 0.5
    %v230 = vmul.f32 %v214, 0.5
    %v231 = vmul.f32 %v215, 0.5
    %v232 = vmul.f32 %v216, 0.5
    %v233 = vmul.f32 %v217, 0.5
    %v234 = vmul.f32 %v218, 0.5
    %v235 = vmul.f32 %v219, 0.5
    %v236 = vmul.f32 %v220, 1.442695
    %v237 = vpow.pop %v236
    %v238 = vmul.f32 %v221, 1.442695
    %v239 = vpow.pop %v238
    %v240 = vmul.f32 %v222, 1.442695
    %v241 = vpow.pop %v240
    %v242 = vmul.f32 %v223, 1.442695
    %v243 = vpow.pop %v242
    %v244 = vmul.f32 %v224, 1.442695
    %v245 = vpow.pop %v244
    %v246 = vmul.f32 %v225, 1.442695
    %v247 = vpow.pop %v246
    %v248 = vmul.f32 %v226, 1.442695
    %v249 = vpow.pop %v248
    %v250 = vmul.f32 %v227, 1.442695
    %v251 = vpow.pop %v250
    %v252 = vmul.f32 %v228, 1.442695
    %v253 = vpow.pop %v252
    %v254 = vmul.f32 %v229, 1.442695
    %v255 = vpow.pop %v254
    %v256 = vmul.f32 %v230, 1.442695
    %v257 = vpow.pop %v256
    %v258 = vmul.f32 %v231, 1.442695
    %v259 = vpow.pop %v258
    %v260 = vmul.f32 %v232, 1.442695
    %v261 = vpow.pop %v260
    %v262 = vmul.f32 %v233, 1.442695
    %v263 = vpow.pop %v262
    %v264 = vmul.f32 %v234, 1.442695
    %v265 = vpow.pop %v264
    %v266 = vmul.f32 %v235, 1.442695
    %v267 = vpow.pop %v266
    %v268 = vld [vmem:[#allocation4] sm:$0xff]
    %v269 = vld [vmem:[#allocation4 + $0x8] sm:$0xff]
    %v270 = vld [vmem:[#allocation4 + $0x10] sm:$0xff]
    %v271 = vld [vmem:[#allocation4 + $0x18] sm:$0xff]
    %v272 = vunpack.c.0.s8 %v268
    %v273 = vunpack.c.1.s8 %v268
    %v274 = vunpack.c.2.s8 %v268
    %v275 = vunpack.c.3.s8 %v268
    %v276 = vunpack.c.0.s8 %v269
    %v277 = vunpack.c.1.s8 %v269
    %v278 = vunpack.c.2.s8 %v269
    %v279 = vunpack.c.3.s8 %v269
    %v280 = vunpack.c.0.s8 %v270
    %v281 = vunpack.c.1.s8 %v270
    %v282 = vunpack.c.2.s8 %v270
    %v283 = vunpack.c.3.s8 %v270
    %v284 = vunpack.c.0.s8 %v271
    %v285 = vunpack.c.1.s8 %v271
    %v286 = vunpack.c.2.s8 %v271
    %v287 = vunpack.c.3.s8 %v271
    %v288 = vcvt.s32.f32 %v272
    %v289 = vcvt.s32.f32 %v273
    %v290 = vcvt.s32.f32 %v274
    %v291 = vcvt.s32.f32 %v275
    %v292 = vcvt.s32.f32 %v276
    %v293 = vcvt.s32.f32 %v277
    %v294 = vcvt.s32.f32 %v278
    %v295 = vcvt.s32.f32 %v279
    %v296 = vcvt.s32.f32 %v280
    %v297 = vcvt.s32.f32 %v281
    %v298 = vcvt.s32.f32 %v282
    %v299 = vcvt.s32.f32 %v283
    %v300 = vcvt.s32.f32 %v284
    %v301 = vcvt.s32.f32 %v285
    %v302 = vcvt.s32.f32 %v286
    %v303 = vcvt.s32.f32 %v287
    %v304 = vmul.f32 %v288, %v237
    %v305 = vmul.f32 %v289, %v239
    %v306 = vmul.f32 %v290, %v241
    %v307 = vmul.f32 %v291, %v243
    %v308 = vmul.f32 %v292, %v245
    %v309 = vmul.f32 %v293, %v247
    %v310 = vmul.f32 %v294, %v249
    %v311 = vmul.f32 %v295, %v251
    %v312 = vmul.f32 %v296, %v253
    %v313 = vmul.f32 %v297, %v255
    %v314 = vmul.f32 %v298, %v257
    %v315 = vmul.f32 %v299, %v259
    %v316 = vmul.f32 %v300, %v261
    %v317 = vmul.f32 %v301, %v263
    %v318 = vmul.f32 %v302, %v265
    %v319 = vmul.f32 %v303, %v267
    %v320 = vld [vmem:[#allocation3] sm:$0xff]
    %v321 = vld [vmem:[#allocation3 + $0x8] sm:$0xff]
    %v322 = vld [vmem:[#allocation3 + $0x10] sm:$0xff]
    %v323 = vld [vmem:[#allocation3 + $0x18] sm:$0xff]
    %v324 = vld [vmem:[#allocation3 + $0x20] sm:$0xff]
    %v325 = vld [vmem:[#allocation3 + $0x28] sm:$0xff]
    %v326 = vld [vmem:[#allocation3 + $0x30] sm:$0xff]
    %v327 = vld [vmem:[#allocation3 + $0x38] sm:$0xff]
    %v328 = vld [vmem:[#allocation3 + $0x40] sm:$0xff]
    %v329 = vld [vmem:[#allocation3 + $0x48] sm:$0xff]
    %v330 = vld [vmem:[#allocation3 + $0x50] sm:$0xff]
    %v331 = vld [vmem:[#allocation3 + $0x58] sm:$0xff]
    %v332 = vld [vmem:[#allocation3 + $0x60] sm:$0xff]
    %v333 = vld [vmem:[#allocation3 + $0x68] sm:$0xff]
    %v334 = vld [vmem:[#allocation3 + $0x70] sm:$0xff]
    %v335 = vld [vmem:[#allocation3 + $0x78] sm:$0xff]
    %336 = vadd.xlane.f32.xlu0 %v304
    %v337 = vpop.xlane.xlu0 %336
    %338 = vadd.xlane.f32.xlu0 %v305
    %v339 = vpop.xlane.xlu0 %338
    %340 = vadd.xlane.f32.xlu0 %v306
    %v341 = vpop.xlane.xlu0 %340
    %342 = vadd.xlane.f32.xlu0 %v307
    %v343 = vpop.xlane.xlu0 %342
    %344 = vadd.xlane.f32.xlu0 %v308
    %v345 = vpop.xlane.xlu0 %344
    %346 = vadd.xlane.f32.xlu0 %v309
    %v347 = vpop.xlane.xlu0 %346
    %348 = vadd.xlane.f32.xlu0 %v310
    %v349 = vpop.xlane.xlu0 %348
    %350 = vadd.xlane.f32.xlu0 %v311
    %v351 = vpop.xlane.xlu0 %350
    %352 = vadd.xlane.f32.xlu0 %v312
    %v353 = vpop.xlane.xlu0 %352
    %354 = vadd.xlane.f32.xlu0 %v313
    %v355 = vpop.xlane.xlu0 %354
    %356 = vadd.xlane.f32.xlu0 %v314
    %v357 = vpop.xlane.xlu0 %356
    %358 = vadd.xlane.f32.xlu0 %v315
    %v359 = vpop.xlane.xlu0 %358
    %360 = vadd.xlane.f32.xlu0 %v316
    %v361 = vpop.xlane.xlu0 %360
    %362 = vadd.xlane.f32.xlu0 %v317
    %v363 = vpop.xlane.xlu0 %362
    %364 = vadd.xlane.f32.xlu0 %v318
    %v365 = vpop.xlane.xlu0 %364
    %366 = vadd.xlane.f32.xlu0 %v319
    %v367 = vpop.xlane.xlu0 %366
    %v368 = vadd.f32 %v320, %v337
    %v369 = vadd.f32 %v321, %v339
    %v370 = vadd.f32 %v322, %v341
    %v371 = vadd.f32 %v323, %v343
    %v372 = vadd.f32 %v324, %v345
    %v373 = vadd.f32 %v325, %v347
    %v374 = vadd.f32 %v326, %v349
    %v375 = vadd.f32 %v327, %v351
    %v376 = vadd.f32 %v328, %v353
    %v377 = vadd.f32 %v329, %v355
    %v378 = vadd.f32 %v330, %v357
    %v379 = vadd.f32 %v331, %v359
    %v380 = vadd.f32 %v332, %v361
    %v381 = vadd.f32 %v333, %v363
    %v382 = vadd.f32 %v334, %v365
    %v383 = vadd.f32 %v335, %v367
    %vm384 = vcmask 7168
    %385 = vst.msk [vmem:[#allocation3] sm:$0xff] %vm384, %v368
    %386 = vst.msk [vmem:[#allocation3 + $0x8] sm:$0xff] %vm384, %v369
    %387 = vst.msk [vmem:[#allocation3 + $0x10] sm:$0xff] %vm384, %v370
    %388 = vst.msk [vmem:[#allocation3 + $0x18] sm:$0xff] %vm384, %v371
    %389 = vst.msk [vmem:[#allocation3 + $0x20] sm:$0xff] %vm384, %v372
    %390 = vst.msk [vmem:[#allocation3 + $0x28] sm:$0xff] %vm384, %v373
    %391 = vst.msk [vmem:[#allocation3 + $0x30] sm:$0xff] %vm384, %v374
    %392 = vst.msk [vmem:[#allocation3 + $0x38] sm:$0xff] %vm384, %v375
    %393 = vst.msk [vmem:[#allocation3 + $0x40] sm:$0xff] %vm384, %v376
    %394 = vst.msk [vmem:[#allocation3 + $0x48] sm:$0xff] %vm384, %v377
    %395 = vst.msk [vmem:[#allocation3 + $0x50] sm:$0xff] %vm384, %v378
    %396 = vst.msk [vmem:[#allocation3 + $0x58] sm:$0xff] %vm384, %v379
    %397 = vst.msk [vmem:[#allocation3 + $0x60] sm:$0xff] %vm384, %v380
    %398 = vst.msk [vmem:[#allocation3 + $0x68] sm:$0xff] %vm384, %v381
    %399 = vst.msk [vmem:[#allocation3 + $0x70] sm:$0xff] %vm384, %v382
    %400 = vst.msk [vmem:[#allocation3 + $0x78] sm:$0xff] %vm384, %v383
    %v401 = vld [vmem:[#allocation2] sm:$0xff]
    %v402 = vld [vmem:[#allocation2 + $0x8] sm:$0xff]
    %v403 = vld [vmem:[#allocation2 + $0x10] sm:$0xff]
    %v404 = vld [vmem:[#allocation2 + $0x18] sm:$0xff]
    %v405 = vld [vmem:[#allocation2 + $0x20] sm:$0xff]
    %v406 = vld [vmem:[#allocation2 + $0x28] sm:$0xff]
    %v407 = vld [vmem:[#allocation2 + $0x30] sm:$0xff]
    %v408 = vld [vmem:[#allocation2 + $0x38] sm:$0xff]
    %v409 = vld [vmem:[#allocation2 + $0x40] sm:$0xff]
    %v410 = vld [vmem:[#allocation2 + $0x48] sm:$0xff]
    %v411 = vld [vmem:[#allocation2 + $0x50] sm:$0xff]
    %v412 = vld [vmem:[#allocation2 + $0x58] sm:$0xff]
    %v413 = vld [vmem:[#allocation2 + $0x60] sm:$0xff]
    %v414 = vld [vmem:[#allocation2 + $0x68] sm:$0xff]
    %v415 = vld [vmem:[#allocation2 + $0x70] sm:$0xff]
    %v416 = vld [vmem:[#allocation2 + $0x78] sm:$0xff]
    %v417 = vld [vmem:[%s2] sm:$0xff]
    %v418 = vld [vmem:[%s2 + $0x8] sm:$0xff]
    %v419 = vld [vmem:[%s2 + $0x10] sm:$0xff]
    %v420 = vld [vmem:[%s2 + $0x18] sm:$0xff]
    %v421 = vld [vmem:[%s2 + $0x20] sm:$0xff]
    %v422 = vld [vmem:[%s2 + $0x28] sm:$0xff]
    %v423 = vld [vmem:[%s2 + $0x30] sm:$0xff]
    %v424 = vld [vmem:[%s2 + $0x38] sm:$0xff]
    %v425 = vld [vmem:[%s2 + $0x40] sm:$0xff]
    %v426 = vld [vmem:[%s2 + $0x48] sm:$0xff]
    %v427 = vld [vmem:[%s2 + $0x50] sm:$0xff]
    %v428 = vld [vmem:[%s2 + $0x58] sm:$0xff]
    %v429 = vld [vmem:[%s2 + $0x60] sm:$0xff]
    %v430 = vld [vmem:[%s2 + $0x68] sm:$0xff]
    %v431 = vld [vmem:[%s2 + $0x70] sm:$0xff]
    %v432 = vld [vmem:[%s2 + $0x78] sm:$0xff]
    %433 = vmatprep.subr.mxu0 0.0
    %434 = vmatpush1.msra.mxu0 %v432
    %435 = vmatprep.subr.mxu0 0.0
    %436 = vmatpush1.msra.mxu0 %v431
    %437 = vmatprep.subr.mxu0 0.0
    %438 = vmatpush1.msra.mxu0 %v430
    %439 = vmatprep.subr.mxu0 0.0
    %440 = vmatpush1.msra.mxu0 %v429
    %441 = vmatprep.subr.mxu0 0.0
    %442 = vmatpush1.msra.mxu0 %v428
    %443 = vmatprep.subr.mxu0 0.0
    %444 = vmatpush1.msra.mxu0 %v427
    %445 = vmatprep.subr.mxu0 0.0
    %446 = vmatpush1.msra.mxu0 %v426
    %447 = vmatprep.subr.mxu0 0.0
    %448 = vmatpush1.msra.mxu0 %v425
    %449 = vmatprep.subr.mxu0 0.0
    %450 = vmatpush1.msra.mxu0 %v424
    %451 = vmatprep.subr.mxu0 0.0
    %452 = vmatpush1.msra.mxu0 %v423
    %453 = vmatprep.subr.mxu0 0.0
    %454 = vmatpush1.msra.mxu0 %v422
    %455 = vmatprep.subr.mxu0 0.0
    %456 = vmatpush1.msra.mxu0 %v421
    %457 = vmatprep.subr.mxu0 0.0
    %458 = vmatpush1.msra.mxu0 %v420
    %459 = vmatprep.subr.mxu0 0.0
    %460 = vmatpush1.msra.mxu0 %v419
    %461 = vmatprep.subr.mxu0 0.0
    %462 = vmatpush1.msra.mxu0 %v418
    %463 = vmatprep.subr.mxu0 0.0
    %464 = vmatpush1.msra.mxu0 %v417
    %465 = vmatprep.subr.mxu0 0.0
    %466 = vmatpush2.msra.mxu0 0.0
    %467 = vmatprep.subr.mxu0 0.0
    %468 = vmatpush2.msra.mxu0 0.0
    %469 = vmatprep.subr.mxu0 0.0
    %470 = vmatpush2.msra.mxu0 0.0
    %471 = vmatprep.subr.mxu0 0.0
    %472 = vmatpush2.msra.mxu0 0.0
    %473 = vmatprep.subr.mxu0 0.0
    %474 = vmatpush2.msra.mxu0 0.0
    %475 = vmatprep.subr.mxu0 0.0
    %476 = vmatpush2.msra.mxu0 0.0
    %477 = vmatprep.subr.mxu0 0.0
    %478 = vmatpush2.msra.mxu0 0.0
    %479 = vmatprep.subr.mxu0 0.0
    %480 = vmatpush2.msra.mxu0 0.0
    %481 = vmatprep.subr.mxu0 0.0
    %482 = vmatpush2.msra.mxu0 0.0
    %483 = vmatprep.subr.mxu0 0.0
    %484 = vmatpush2.msra.mxu0 0.0
    %485 = vmatprep.subr.mxu0 0.0
    %486 = vmatpush2.msra.mxu0 0.0
    %487 = vmatprep.subr.mxu0 0.0
    %488 = vmatpush2.msra.mxu0 0.0
    %489 = vmatprep.subr.mxu0 0.0
    %490 = vmatpush2.msra.mxu0 0.0
    %491 = vmatprep.subr.mxu0 0.0
    %492 = vmatpush2.msra.mxu0 0.0
    %493 = vmatprep.subr.mxu0 0.0
    %494 = vmatpush2.msra.mxu0 0.0
    %495 = vmatprep.subr.mxu0 0.0
    %496 = vmatpush2.msra.mxu0 0.0
    %497 = vmatprep.mubr.f32.mxu0 0.0
    %498 = vmatmul.mubr.f32.gmra.mxu0 %v304
    %v499 = vpop.f32.mrf.mxu0
    %v500 = vadd.f32 0.0, %v499
    %v501 = vpop.f32.mrf.mxu0
    %502 = vmatprep.mubr.f32.mxu0 0.0
    %503 = vmatmul.mubr.f32.gmra.mxu0 %v305
    %v504 = vpop.f32.mrf.mxu0
    %v505 = vadd.f32 0.0, %v504
    %v506 = vpop.f32.mrf.mxu0
    %507 = vmatprep.mubr.f32.mxu0 0.0
    %508 = vmatmul.mubr.f32.gmra.mxu0 %v306
    %v509 = vpop.f32.mrf.mxu0
    %v510 = vadd.f32 0.0, %v509
    %v511 = vpop.f32.mrf.mxu0
    %512 = vmatprep.mubr.f32.mxu0 0.0
    %513 = vmatmul.mubr.f32.gmra.mxu0 %v307
    %v514 = vpop.f32.mrf.mxu0
    %v515 = vadd.f32 0.0, %v514
    %v516 = vpop.f32.mrf.mxu0
    %517 = vmatprep.mubr.f32.mxu0 0.0
    %518 = vmatmul.mubr.f32.gmra.mxu0 %v308
    %v519 = vpop.f32.mrf.mxu0
    %v520 = vadd.f32 0.0, %v519
    %v521 = vpop.f32.mrf.mxu0
    %522 = vmatprep.mubr.f32.mxu0 0.0
    %523 = vmatmul.mubr.f32.gmra.mxu0 %v309
    %v524 = vpop.f32.mrf.mxu0
    %v525 = vadd.f32 0.0, %v524
    %v526 = vpop.f32.mrf.mxu0
    %527 = vmatprep.mubr.f32.mxu0 0.0
    %528 = vmatmul.mubr.f32.gmra.mxu0 %v310
    %v529 = vpop.f32.mrf.mxu0
    %v530 = vadd.f32 0.0, %v529
    %v531 = vpop.f32.mrf.mxu0
    %532 = vmatprep.mubr.f32.mxu0 0.0
    %533 = vmatmul.mubr.f32.gmra.mxu0 %v311
    %v534 = vpop.f32.mrf.mxu0
    %v535 = vadd.f32 0.0, %v534
    %v536 = vpop.f32.mrf.mxu0
    %537 = vmatprep.mubr.f32.mxu0 0.0
    %538 = vmatmul.mubr.f32.gmra.mxu0 %v312
    %v539 = vpop.f32.mrf.mxu0
    %v540 = vadd.f32 0.0, %v539
    %v541 = vpop.f32.mrf.mxu0
    %542 = vmatprep.mubr.f32.mxu0 0.0
    %543 = vmatmul.mubr.f32.gmra.mxu0 %v313
    %v544 = vpop.f32.mrf.mxu0
    %v545 = vadd.f32 0.0, %v544
    %v546 = vpop.f32.mrf.mxu0
    %547 = vmatprep.mubr.f32.mxu0 0.0
    %548 = vmatmul.mubr.f32.gmra.mxu0 %v314
    %v549 = vpop.f32.mrf.mxu0
    %v550 = vadd.f32 0.0, %v549
    %v551 = vpop.f32.mrf.mxu0
    %552 = vmatprep.mubr.f32.mxu0 0.0
    %553 = vmatmul.mubr.f32.gmra.mxu0 %v315
    %v554 = vpop.f32.mrf.mxu0
    %v555 = vadd.f32 0.0, %v554
    %v556 = vpop.f32.mrf.mxu0
    %557 = vmatprep.mubr.f32.mxu0 0.0
    %558 = vmatmul.mubr.f32.gmra.mxu0 %v316
    %v559 = vpop.f32.mrf.mxu0
    %v560 = vadd.f32 0.0, %v559
    %v561 = vpop.f32.mrf.mxu0
    %562 = vmatprep.mubr.f32.mxu0 0.0
    %563 = vmatmul.mubr.f32.gmra.mxu0 %v317
    %v564 = vpop.f32.mrf.mxu0
    %v565 = vadd.f32 0.0, %v564
    %v566 = vpop.f32.mrf.mxu0
    %567 = vmatprep.mubr.f32.mxu0 0.0
    %568 = vmatmul.mubr.f32.gmra.mxu0 %v318
    %v569 = vpop.f32.mrf.mxu0
    %v570 = vadd.f32 0.0, %v569
    %v571 = vpop.f32.mrf.mxu0
    %572 = vmatprep.mubr.f32.mxu0 0.0
    %573 = vmatmul.mubr.f32.gmra.mxu0 %v319
    %v574 = vpop.f32.mrf.mxu0
    %v575 = vadd.f32 0.0, %v574
    %v576 = vpop.f32.mrf.mxu0
    %577 = vdwg.mxu0
    %v578 = vadd.f32 %v401, %v500
    %v579 = vadd.f32 %v402, %v505
    %v580 = vadd.f32 %v403, %v510
    %v581 = vadd.f32 %v404, %v515
    %v582 = vadd.f32 %v405, %v520
    %v583 = vadd.f32 %v406, %v525
    %v584 = vadd.f32 %v407, %v530
    %v585 = vadd.f32 %v408, %v535
    %v586 = vadd.f32 %v409, %v540
    %v587 = vadd.f32 %v410, %v545
    %v588 = vadd.f32 %v411, %v550
    %v589 = vadd.f32 %v412, %v555
    %v590 = vadd.f32 %v413, %v560
    %v591 = vadd.f32 %v414, %v565
    %v592 = vadd.f32 %v415, %v570
    %v593 = vadd.f32 %v416, %v575
    %594 = vst [vmem:[#allocation2] sm:$0xff] %v578
    %595 = vst [vmem:[#allocation2 + $0x8] sm:$0xff] %v579
    %596 = vst [vmem:[#allocation2 + $0x10] sm:$0xff] %v580
    %597 = vst [vmem:[#allocation2 + $0x18] sm:$0xff] %v581
    %598 = vst [vmem:[#allocation2 + $0x20] sm:$0xff] %v582
    %599 = vst [vmem:[#allocation2 + $0x28] sm:$0xff] %v583
    %600 = vst [vmem:[#allocation2 + $0x30] sm:$0xff] %v584
    %601 = vst [vmem:[#allocation2 + $0x38] sm:$0xff] %v585
    %602 = vst [vmem:[#allocation2 + $0x40] sm:$0xff] %v586
    %603 = vst [vmem:[#allocation2 + $0x48] sm:$0xff] %v587
    %604 = vst [vmem:[#allocation2 + $0x50] sm:$0xff] %v588
    %605 = vst [vmem:[#allocation2 + $0x58] sm:$0xff] %v589
    %606 = vst [vmem:[#allocation2 + $0x60] sm:$0xff] %v590
    %607 = vst [vmem:[#allocation2 + $0x68] sm:$0xff] %v591
    %608 = vst [vmem:[#allocation2 + $0x70] sm:$0xff] %v592
    %609 = vst [vmem:[#allocation2 + $0x78] sm:$0xff] %v593
    // Predicated region
    $region26: #{tpu_custom_call.1} parent=1 // pred_check
      %p610 = pneg %p32
    $region27: #{tpu_custom_call.1} parent=1 // pred_check_branch
      %612 = sbr.rel (%p610) target = $region29
    $region28: #{tpu_custom_call.1} parent=1 // pred_region
      %v613 = vld [vmem:[#allocation3] sm:$0xff]
      %v614 = vld [vmem:[#allocation3 + $0x8] sm:$0xff]
      %v615 = vld [vmem:[#allocation3 + $0x10] sm:$0xff]
      %v616 = vld [vmem:[#allocation3 + $0x18] sm:$0xff]
      %v617 = vld [vmem:[#allocation3 + $0x20] sm:$0xff]
      %v618 = vld [vmem:[#allocation3 + $0x28] sm:$0xff]
      %v619 = vld [vmem:[#allocation3 + $0x30] sm:$0xff]
      %v620 = vld [vmem:[#allocation3 + $0x38] sm:$0xff]
      %v621 = vld [vmem:[#allocation3 + $0x40] sm:$0xff]
      %v622 = vld [vmem:[#allocation3 + $0x48] sm:$0xff]
      %v623 = vld [vmem:[#allocation3 + $0x50] sm:$0xff]
      %v624 = vld [vmem:[#allocation3 + $0x58] sm:$0xff]
      %v625 = vld [vmem:[#allocation3 + $0x60] sm:$0xff]
      %v626 = vld [vmem:[#allocation3 + $0x68] sm:$0xff]
      %v627 = vld [vmem:[#allocation3 + $0x70] sm:$0xff]
      %v628 = vld [vmem:[#allocation3 + $0x78] sm:$0xff]
      %vm629 = vcmp.gt.f32.partialorder %v613, 0.0
      %vm630 = vcmp.gt.f32.partialorder %v614, 0.0
      %vm631 = vcmp.gt.f32.partialorder %v615, 0.0
      %vm632 = vcmp.gt.f32.partialorder %v616, 0.0
      %vm633 = vcmp.gt.f32.partialorder %v617, 0.0
      %vm634 = vcmp.gt.f32.partialorder %v618, 0.0
      %vm635 = vcmp.gt.f32.partialorder %v619, 0.0
      %vm636 = vcmp.gt.f32.partialorder %v620, 0.0
      %vm637 = vcmp.gt.f32.partialorder %v621, 0.0
      %vm638 = vcmp.gt.f32.partialorder %v622, 0.0
      %vm639 = vcmp.gt.f32.partialorder %v623, 0.0
      %vm640 = vcmp.gt.f32.partialorder %v624, 0.0
      %vm641 = vcmp.gt.f32.partialorder %v625, 0.0
      %vm642 = vcmp.gt.f32.partialorder %v626, 0.0
      %vm643 = vcmp.gt.f32.partialorder %v627, 0.0
      %vm644 = vcmp.gt.f32.partialorder %v628, 0.0
      %v645 = vsel %vm629, %v613, 1.0
      %v646 = vsel %vm630, %v614, 1.0
      %v647 = vsel %vm631, %v615, 1.0
      %v648 = vsel %vm632, %v616, 1.0
      %v649 = vsel %vm633, %v617, 1.0
      %v650 = vsel %vm634, %v618, 1.0
      %v651 = vsel %vm635, %v619, 1.0
      %v652 = vsel %vm636, %v620, 1.0
      %v653 = vsel %vm637, %v621, 1.0
      %v654 = vsel %vm638, %v622, 1.0
      %v655 = vsel %vm639, %v623, 1.0
      %v656 = vsel %vm640, %v624, 1.0
      %v657 = vsel %vm641, %v625, 1.0
      %v658 = vsel %vm642, %v626, 1.0
      %v659 = vsel %vm643, %v627, 1.0
      %v660 = vsel %vm644, %v628, 1.0
      %v661 = vrcp.pop %v645
      %v662 = vrcp.pop %v646
      %v663 = vrcp.pop %v647
      %v664 = vrcp.pop %v648
      %v665 = vrcp.pop %v649
      %v666 = vrcp.pop %v650
      %v667 = vrcp.pop %v651
      %v668 = vrcp.pop %v652
      %v669 = vrcp.pop %v653
      %v670 = vrcp.pop %v654
      %v671 = vrcp.pop %v655
      %v672 = vrcp.pop %v656
      %v673 = vrcp.pop %v657
      %v674 = vrcp.pop %v658
      %v675 = vrcp.pop %v659
      %v676 = vrcp.pop %v660
      %v677 = vmul.f32 %v645, %v661
      %v678 = vmul.f32 %v646, %v662
      %v679 = vmul.f32 %v647, %v663
      %v680 = vmul.f32 %v648, %v664
      %v681 = vmul.f32 %v649, %v665
      %v682 = vmul.f32 %v650, %v666
      %v683 = vmul.f32 %v651, %v667
      %v684 = vmul.f32 %v652, %v668
      %v685 = vmul.f32 %v653, %v669
      %v686 = vmul.f32 %v654, %v670
      %v687 = vmul.f32 %v655, %v671
      %v688 = vmul.f32 %v656, %v672
      %v689 = vmul.f32 %v657, %v673
      %v690 = vmul.f32 %v658, %v674
      %v691 = vmul.f32 %v659, %v675
      %v692 = vmul.f32 %v660, %v676
      %v693 = vsub.f32 2.0, %v677
      %v694 = vsub.f32 2.0, %v678
      %v695 = vsub.f32 2.0, %v679
      %v696 = vsub.f32 2.0, %v680
      %v697 = vsub.f32 2.0, %v681
      %v698 = vsub.f32 2.0, %v682
      %v699 = vsub.f32 2.0, %v683
      %v700 = vsub.f32 2.0, %v684
      %v701 = vsub.f32 2.0, %v685
      %v702 = vsub.f32 2.0, %v686
      %v703 = vsub.f32 2.0, %v687
      %v704 = vsub.f32 2.0, %v688
      %v705 = vsub.f32 2.0, %v689
      %v706 = vsub.f32 2.0, %v690
      %v707 = vsub.f32 2.0, %v691
      %v708 = vsub.f32 2.0, %v692
      %v709 = vmul.f32 %v661, %v693
      %v710 = vmul.f32 %v662, %v694
      %v711 = vmul.f32 %v663, %v695
      %v712 = vmul.f32 %v664, %v696
      %v713 = vmul.f32 %v665, %v697
      %v714 = vmul.f32 %v666, %v698
      %v715 = vmul.f32 %v667, %v699
      %v716 = vmul.f32 %v668, %v700
      %v717 = vmul.f32 %v669, %v701
      %v718 = vmul.f32 %v670, %v702
      %v719 = vmul.f32 %v671, %v703
      %v720 = vmul.f32 %v672, %v704
      %v721 = vmul.f32 %v673, %v705
      %v722 = vmul.f32 %v674, %v706
      %v723 = vmul.f32 %v675, %v707
      %v724 = vmul.f32 %v676, %v708
      %v725 = vld [vmem:[#allocation2] sm:$0xff]
      %v726 = vld [vmem:[#allocation2 + $0x8] sm:$0xff]
      %v727 = vld [vmem:[#allocation2 + $0x10] sm:$0xff]
      %v728 = vld [vmem:[#allocation2 + $0x18] sm:$0xff]
      %v729 = vld [vmem:[#allocation2 + $0x20] sm:$0xff]
      %v730 = vld [vmem:[#allocation2 + $0x28] sm:$0xff]
      %v731 = vld [vmem:[#allocation2 + $0x30] sm:$0xff]
      %v732 = vld [vmem:[#allocation2 + $0x38] sm:$0xff]
      %v733 = vld [vmem:[#allocation2 + $0x40] sm:$0xff]
      %v734 = vld [vmem:[#allocation2 + $0x48] sm:$0xff]
      %v735 = vld [vmem:[#allocation2 + $0x50] sm:$0xff]
      %v736 = vld [vmem:[#allocation2 + $0x58] sm:$0xff]
      %v737 = vld [vmem:[#allocation2 + $0x60] sm:$0xff]
      %v738 = vld [vmem:[#allocation2 + $0x68] sm:$0xff]
      %v739 = vld [vmem:[#allocation2 + $0x70] sm:$0xff]
      %v740 = vld [vmem:[#allocation2 + $0x78] sm:$0xff]
      %742 = vset.pattern.permute.xlu0 0
      %743 = vperm.xlu0 %742, %v709
      %v744 = vpop.permute.xlu0 %743
      %747 = vset.pattern.permute.xlu0 0
      %748 = vperm.xlu0 %747, %v710
      %v749 = vpop.permute.xlu0 %748
      %752 = vset.pattern.permute.xlu0 0
      %753 = vperm.xlu0 %752, %v711
      %v754 = vpop.permute.xlu0 %753
      %757 = vset.pattern.permute.xlu0 0
      %758 = vperm.xlu0 %757, %v712
      %v759 = vpop.permute.xlu0 %758
      %762 = vset.pattern.permute.xlu0 0
      %763 = vperm.xlu0 %762, %v713
      %v764 = vpop.permute.xlu0 %763
      %767 = vset.pattern.permute.xlu0 0
      %768 = vperm.xlu0 %767, %v714
      %v769 = vpop.permute.xlu0 %768
      %772 = vset.pattern.permute.xlu0 0
      %773 = vperm.xlu0 %772, %v715
      %v774 = vpop.permute.xlu0 %773
      %777 = vset.pattern.permute.xlu0 0
      %778 = vperm.xlu0 %777, %v716
      %v779 = vpop.permute.xlu0 %778
      %782 = vset.pattern.permute.xlu0 0
      %783 = vperm.xlu0 %782, %v717
      %v784 = vpop.permute.xlu0 %783
      %787 = vset.pattern.permute.xlu0 0
      %788 = vperm.xlu0 %787, %v718
      %v789 = vpop.permute.xlu0 %788
      %792 = vset.pattern.permute.xlu0 0
      %793 = vperm.xlu0 %792, %v719
      %v794 = vpop.permute.xlu0 %793
      %797 = vset.pattern.permute.xlu0 0
      %798 = vperm.xlu0 %797, %v720
      %v799 = vpop.permute.xlu0 %798
      %802 = vset.pattern.permute.xlu0 0
      %803 = vperm.xlu0 %802, %v721
      %v804 = vpop.permute.xlu0 %803
      %807 = vset.pattern.permute.xlu0 0
      %808 = vperm.xlu0 %807, %v722
      %v809 = vpop.permute.xlu0 %808
      %812 = vset.pattern.permute.xlu0 0
      %813 = vperm.xlu0 %812, %v723
      %v814 = vpop.permute.xlu0 %813
      %817 = vset.pattern.permute.xlu0 0
      %818 = vperm.xlu0 %817, %v724
      %v819 = vpop.permute.xlu0 %818
      %v821 = vmul.f32 %v725, %v744
      %v822 = vmul.f32 %v726, %v749
      %v823 = vmul.f32 %v727, %v754
      %v824 = vmul.f32 %v728, %v759
      %v825 = vmul.f32 %v729, %v764
      %v826 = vmul.f32 %v730, %v769
      %v827 = vmul.f32 %v731, %v774
      %v828 = vmul.f32 %v732, %v779
      %v829 = vmul.f32 %v733, %v784
      %v830 = vmul.f32 %v734, %v789
      %v831 = vmul.f32 %v735, %v794
      %v832 = vmul.f32 %v736, %v799
      %v833 = vmul.f32 %v737, %v804
      %v834 = vmul.f32 %v738, %v809
      %v835 = vmul.f32 %v739, %v814
      %v836 = vmul.f32 %v740, %v819
      %837 = vst [vmem:[#allocation7] sm:$0xff] %v821
      %838 = vst [vmem:[#allocation7 + $0x8] sm:$0xff] %v822
      %839 = vst [vmem:[#allocation7 + $0x10] sm:$0xff] %v823
      %840 = vst [vmem:[#allocation7 + $0x18] sm:$0xff] %v824
      %841 = vst [vmem:[#allocation7 + $0x20] sm:$0xff] %v825
      %842 = vst [vmem:[#allocation7 + $0x28] sm:$0xff] %v826
      %843 = vst [vmem:[#allocation7 + $0x30] sm:$0xff] %v827
      %844 = vst [vmem:[#allocation7 + $0x38] sm:$0xff] %v828
      %845 = vst [vmem:[#allocation7 + $0x40] sm:$0xff] %v829
      %846 = vst [vmem:[#allocation7 + $0x48] sm:$0xff] %v830
      %847 = vst [vmem:[#allocation7 + $0x50] sm:$0xff] %v831
      %848 = vst [vmem:[#allocation7 + $0x58] sm:$0xff] %v832
      %849 = vst [vmem:[#allocation7 + $0x60] sm:$0xff] %v833
      %850 = vst [vmem:[#allocation7 + $0x68] sm:$0xff] %v834
      %851 = vst [vmem:[#allocation7 + $0x70] sm:$0xff] %v835
      %852 = vst [vmem:[#allocation7 + $0x78] sm:$0xff] %v836
    $region29: #{tpu_custom_call.1} parent=1 // pred_fallthru
      _
    // Predicated region
    $region30: #{tpu_custom_call.1} parent=1 // pred_check
      _
    $region31: #{tpu_custom_call.1} parent=1 // pred_check_branch
      %854 = sbr.rel (0) target = $region33
    $region32: #{tpu_custom_call.1} parent=1 // pred_region
      %s856 = ssub.s32 2048, 2048
      %857 = vsyncadd [#allocation6], %s856
      %s858 = sshll.u32 [#allocation7], 4
      %s859 = int_to_ptr.vmem [resolvable:$true] %s858
      %864 = dma.vmem_to_hbm [thread:$0]  %s859, 2048, %s4, [#allocation6], 128, 128, 8
    $region33: #{tpu_custom_call.1} parent=1 // pred_fallthru
      _
    // Predicated region
    $region34: #{tpu_custom_call.1} parent=1 // pred_check
      _
    $region35: #{tpu_custom_call.1} parent=1 // pred_check_branch
      %866 = sbr.rel (0) target = $region37
    $region36: #{tpu_custom_call.1} parent=1 // pred_region
      %867 = dma.done [#allocation6], 2048
    $region37: #{tpu_custom_call.1} parent=1 // pred_fallthru
      _
    %868 = vsyncpa [#allocation5], 1
    %869 = vsyncpa [#allocation6], 1

</llo_original>
